<compile_context>
chip_gen: v6e
topology: v6e:2x2x1
jax: 0.10.0
libtpu: 0.0.40
codegen_flags: <defaults>
</compile_context>

<pallas_src>
import jax
import jax.numpy as jnp
from jax import lax
from jax.experimental import pallas as pl
from jax.experimental.pallas import tpu as pltpu


SIGMA_DATA = 1.0  # EDM sigma_data used by the denoiser scalings and the loss weighting


def _vmem_capacity_bytes():
    """Physical per-TensorCore VMEM; conservative fallback = v7x (64 MiB)."""
    try:
        info = pltpu.get_tpu_info()
        return int(getattr(info, "vmem_capacity_bytes", 64 << 20))
    except Exception:
        return 64 << 20


def _pick_sub_rows(R, C, itemsize, cap=256):
    """Rows per MXU sub-chunk: caps the block-diag kron weight at (cap, cap)."""
    if R <= cap:
        return R
    base = 16 if itemsize == 2 else 8            # clean sublane slicing of the refs
    align = C
    while align % base:                           # smallest multiple of C that is also
        align += C                                # a multiple of the sublane packing
    best = None
    d = align
    while d <= cap:
        if R % d == 0:
            best = d
        d += align
    return best if best is not None else R        # fallback: no chunking (always legal)


def _vmem_budget_bytes(Bt, C, HW, itemsize, sub_rows):
    """Estimate of what actually lives in VMEM for one grid step."""
    R = Bt * C
    in_blocks = 2 * 2 * R * HW * itemsize         # x + noise, double-buffered
    coef = 2 * R * 128 * 4                        # (R,5) f32 coefficient block, lane-padded
    out = 2 * R * 128 * 4                         # (R,1) f32 output block, lane-padded
    weight = 2 * sub_rows * sub_rows * 2          # bf16 kron(I_Bm, W) constant block
    temps = 4 * sub_rows * HW * 4                 # live f32/bf16 temporaries per sub-chunk
    return in_blocks + coef + out + weight + temps


def _pick_bt(B, C, HW, itemsize, vmem_cap):
    """Batch elements per grid step: legal sublane tiling, VMEM budget, >=2 steps."""
    sub = 16 if itemsize == 2 else (32 if itemsize == 1 else 8)
    budget = int(0.6 * vmem_cap)                  # headroom under the compiler limit
    tile_cap = (2 << 20) if vmem_cap <= (64 << 20) else (4 << 20)

    divisors = [d for d in range(1, B + 1) if B % d == 0]
    legal = [d for d in divisors if d == B or (d * C) % sub == 0]
    if not legal:
        legal = [B]

    def fits(d):
        sr = _pick_sub_rows(d * C, C, itemsize)
        return _vmem_budget_bytes(d, C, HW, itemsize, sr) <= budget

    fitting = [d for d in legal if fits(d)] or [min(legal)]
    # prefer >=2 grid steps (megacore split on v7x + DMA/compute overlap)
    multi = [d for d in fitting if B // d >= 2]
    pool = multi if multi else fitting
    # per-step overhead is ~0.35us: no need for huge blocks
    capped = [d for d in pool if d * C * HW * itemsize <= tile_cap]
    pool = capped if capped else pool
    return max(pool)


def standard_diffusion_loss(x_nchw, noise_nchw, sigmas, w_net, b_net):
    """Returns per-batch-element weighted L2 loss, shape (B,)."""
    B, C, H, W = x_nchw.shape
    HW = H * W
    in_dtype = x_nchw.dtype
    itemsize = jnp.dtype(in_dtype).itemsize

    # Free, contiguous view NCHW -> (B*C, HW); keep native (bf16) dtype in HBM.
    x2d = x_nchw.reshape(B * C, HW)
    n2d = noise_nchw.reshape(B * C, HW)

    vmem_cap = _vmem_capacity_bytes()
    Bt = _pick_bt(B, C, HW, itemsize, vmem_cap)
    R = Bt * C                                    # rows per grid step
    sub_rows = _pick_sub_rows(R, C, itemsize)     # rows per MXU sub-chunk (<= 256)
    n_sub = R // sub_rows
    Bm = sub_rows // C

    # ---- O(B*C) host-side scalar prep (not the full-array pre-scale anti-pattern) ----
    sig = sigmas.astype(jnp.float32)
    sd2 = SIGMA_DATA * SIGMA_DATA
    denom = sig * sig + sd2
    inv_sqrt = lax.rsqrt(denom)
    c_skip = sd2 / denom
    c_out = (SIGMA_DATA * sig) * inv_sqrt
    c_in = inv_sqrt
    w_loss = denom / (sig * sig * sd2)            # EDM loss weighting
    inv_n = 1.0 / float(C * HW)

    rep = lambda v: jnp.repeat(v, C)              # per-batch -> per-row
    coef = jnp.stack(
        [
            rep(sig),                                               # [0] sigma
            rep(c_in * c_out),                                      # [1] a = c_in*c_out
            rep(c_skip) - 1.0,                                      # [2] c_skip - 1
            jnp.tile(b_net.astype(jnp.float32), B) * rep(c_out),    # [3] bias[c]*c_out[b]
            rep(w_loss) * inv_n,                                    # [4] loss weight / (C*HW)
        ],
        axis=1,
    )                                             # (B*C, 5) f32

    # Small block-diagonal channel-mix weight (bf16 -> native MXU throughput).
    w_small = jnp.kron(jnp.eye(Bm, dtype=jnp.float32),
                       w_net.astype(jnp.float32)).astype(jnp.bfloat16)  # (sub_rows, sub_rows)

    def kernel(coef_ref, x_ref, n_ref, w_ref, out_ref):
        # Unrolled loop over MXU sub-chunks: keeps MXU FLOPs independent of Bt
        # and limits live f32 temporaries to one sub-chunk at a time.
        for m in range(n_sub):
            rows = slice(m * sub_rows, (m + 1) * sub_rows)
            x = x_ref[rows, :].astype(jnp.float32)
            n = n_ref[rows, :].astype(jnp.float32)
            sigr = coef_ref[rows, 0:1]            # sigma per row
            a = coef_ref[rows, 1:2]               # c_in * c_out
            cm1 = coef_ref[rows, 2:3]             # c_skip - 1
            bco = coef_ref[rows, 3:4]             # bias[c] * c_out[b]
            wrow = coef_ref[rows, 4:5]            # EDM weight / (C*HW)

            scaled_n = n * sigr
            noised = x + scaled_n                 # noised_input = input + noise * sigma
            # 1x1-conv channel mix: bf16 MXU matmul with kron(I_Bm, W), f32 accumulate.
            raw = jnp.dot(w_ref[...], noised.astype(jnp.bfloat16),
                          preferred_element_type=jnp.float32)
            # diff = model_out - input, fully folded:
            #   model_out = c_out*(c_in*(W@noised) + b) + c_skip*noised
            #   diff      = a*raw + bco + (c_skip-1)*noised + sigma*noise
            diff = a * raw + cm1 * noised + scaled_n + bco
            out_ref[rows, :] = wrow * jnp.sum(diff * diff, axis=1, keepdims=True)

    grid = (B // Bt,)
    budget_est = _vmem_budget_bytes(Bt, C, HW, itemsize, sub_rows)
    vmem_limit = int(min(int(0.75 * vmem_cap), max(32 << 20, 2 * budget_est)))
    vmem_limit = max(vmem_limit, 8 << 20)

    row_loss = pl.pallas_call(
        kernel,
        out_shape=jax.ShapeDtypeStruct((B * C, 1), jnp.float32),
        grid=grid,
        in_specs=[
            pl.BlockSpec((R, 5), lambda i: (i, 0)),                 # fused per-row coefficients
            pl.BlockSpec((R, HW), lambda i: (i, 0)),                # input (native dtype)
            pl.BlockSpec((R, HW), lambda i: (i, 0)),                # noise (native dtype)
            pl.BlockSpec((sub_rows, sub_rows), lambda i: (0, 0)),   # kron(I_Bm, W) bf16, constant
        ],
        out_specs=pl.BlockSpec((R, 1), lambda i: (i, 0)),
        compiler_params=pltpu.CompilerParams(
            dimension_semantics=("parallel",),    # batch chunks are independent
            vmem_limit_bytes=vmem_limit,
        ),
    )(coef, x2d, n2d, w_small)

    # Tiny final combine (C floats per batch element):
    # loss[b] = sum_c row_loss[b*C + c] == mean(w * diff^2) over (C, H, W).
    return row_loss.reshape(B, C).sum(axis=1)


def _reference_loss(x_nchw, noise_nchw, sigmas, w_net, b_net):
    """Pure-JAX f32 reference mirroring the PyTorch semantics (l2)."""
    B, C, H, W = x_nchw.shape
    x = x_nchw.astype(jnp.float32)
    noise = noise_nchw.astype(jnp.float32)
    sig = sigmas.astype(jnp.float32)[:, None, None, None]
    noised = x + noise * sig
    denom = sig * sig + SIGMA_DATA**2
    c_skip = SIGMA_DATA**2 / denom
    c_out = sig * SIGMA_DATA * lax.rsqrt(denom)
    c_in = lax.rsqrt(denom)
    net_in = noised * c_in
    net_out = (jnp.einsum("oc,bchw->bohw", w_net.astype(jnp.float32), net_in)
               + b_net.reshape(1, C, 1, 1).astype(jnp.float32))
    model_output = net_out * c_out + noised * c_skip
    w = denom / (sig * sig * SIGMA_DATA**2)
    return jnp.mean((w * (model_output - x) ** 2).reshape(B, -1), axis=1)


if __name__ == "__main__":
    B, C, H, W = 2, 4, 16, 16

    key = jax.random.PRNGKey(0)
    k_x, k_noise, k_sigma, k_w, k_b = jax.random.split(key, 5)

    # input latents (NCHW); kept bf16 through HBM, cast to f32 inside the kernel
    x = jax.random.normal(k_x, (B, C, H, W), dtype=jnp.float32).astype(jnp.bfloat16)

    # noise = torch.randn_like(input)
    noise = jax.random.normal(k_noise, (B, C, H, W), dtype=jnp.float32).astype(jnp.bfloat16)

    # sigma_sampler: EDMSampling -> sigma = exp(p_mean + p_std * randn(B))
    p_mean, p_std = -1.2, 1.2
    sigmas = jnp.exp(p_mean + p_std * jax.random.normal(k_sigma, (B,), dtype=jnp.float32))

    # deterministic synthetic network parameters (1x1 conv over channels)
    w_net = 0.5 * jax.random.normal(k_w, (C, C), dtype=jnp.float32)
    b_net = 0.1 * jax.random.normal(k_b, (C,), dtype=jnp.float32)

    loss = standard_diffusion_loss(x, noise, sigmas, w_net, b_net)
    loss = jax.block_until_ready(loss)

    ref = _reference_loss(x, noise, sigmas, w_net, b_net)
    assert loss.shape == (B,)
    # Tolerance loosened vs an all-f32 check: the channel-mix matmul feeds the
    # MXU bf16 operands (f32 accumulate), per the performance review.
    assert jnp.allclose(loss, ref, rtol=3e-2, atol=1e-4), (loss, ref)

    print("KERNEL_OK")
</pallas_src>

<mosaic_0001>
module attributes {stable_mosaic.version = 11 : i64} {
  func.func @kernel(%arg0: i32, %arg1: memref<8x5xf32, #tpu.memory_space<vmem>>, %arg2: memref<8x256xbf16, #tpu.memory_space<vmem>>, %arg3: memref<8x256xbf16, #tpu.memory_space<vmem>>, %arg4: memref<8x8xbf16, #tpu.memory_space<vmem>>, %arg5: memref<8x1xf32, #tpu.memory_space<vmem>>) attributes {dimension_semantics = [#tpu.dimension_semantics<parallel>], iteration_bounds = array<i64: 1>, scalar_prefetch = 0 : i64, scratch_operands = 0 : i64, tpu.core_type = #tpu.core_type<tc>, window_params = [{transform_indices = @transform_0, window_bounds = array<i64: 8, 5>}, {transform_indices = @transform_1, window_bounds = array<i64: 8, 256>}, {transform_indices = @transform_2, window_bounds = array<i64: 8, 256>}, {pipeline_mode = #tpu.pipeline_mode<synchronous>, transform_indices = @transform_3, window_bounds = array<i64: 8, 8>}, {transform_indices = @transform_4, window_bounds = array<i64: 8, 1>}]} {
    %c0 = arith.constant 0 : index
    %c0_0 = arith.constant 0 : index
    %0 = vector.load %arg2[%c0, %c0_0] : memref<8x256xbf16, #tpu.memory_space<vmem>>, vector<8x256xbf16>
    %1 = arith.extf %0 : vector<8x256xbf16> to vector<8x256xf32>
    %c0_1 = arith.constant 0 : index
    %c0_2 = arith.constant 0 : index
    %2 = vector.load %arg3[%c0_1, %c0_2] : memref<8x256xbf16, #tpu.memory_space<vmem>>, vector<8x256xbf16>
    %3 = arith.extf %2 : vector<8x256xbf16> to vector<8x256xf32>
    %c0_3 = arith.constant 0 : index
    %c0_4 = arith.constant 0 : index
    %4 = vector.load %arg1[%c0_3, %c0_4] : memref<8x5xf32, #tpu.memory_space<vmem>>, vector<8x1xf32>
    %c0_5 = arith.constant 0 : index
    %c1 = arith.constant 1 : index
    %5 = vector.load %arg1[%c0_5, %c1] : memref<8x5xf32, #tpu.memory_space<vmem>>, vector<8x1xf32>
    %c0_6 = arith.constant 0 : index
    %c2 = arith.constant 2 : index
    %6 = vector.load %arg1[%c0_6, %c2] : memref<8x5xf32, #tpu.memory_space<vmem>>, vector<8x1xf32>
    %c0_7 = arith.constant 0 : index
    %c3 = arith.constant 3 : index
    %7 = vector.load %arg1[%c0_7, %c3] : memref<8x5xf32, #tpu.memory_space<vmem>>, vector<8x1xf32>
    %c0_8 = arith.constant 0 : index
    %c4 = arith.constant 4 : index
    %8 = vector.load %arg1[%c0_8, %c4] : memref<8x5xf32, #tpu.memory_space<vmem>>, vector<8x1xf32>
    %9 = vector.broadcast %4 : vector<8x1xf32> to vector<8x256xf32>
    %10 = arith.mulf %3, %9 : vector<8x256xf32>
    %11 = arith.addf %1, %10 : vector<8x256xf32>
    %c0_9 = arith.constant 0 : index
    %c0_10 = arith.constant 0 : index
    %12 = vector.load %arg4[%c0_9, %c0_10] : memref<8x8xbf16, #tpu.memory_space<vmem>>, vector<8x8xbf16>
    %13 = arith.truncf %11 : vector<8x256xf32> to vector<8x256xbf16>
    %cst = arith.constant dense<0.000000e+00> : vector<8x256xf32>
    %14 = tpu.matmul %12, %13, %cst {dimension_numbers = #tpu.dot_dimension_numbers<[1], [0], [0], [1], [0, 0, 1, 1], [], []>} : vector<8x8xbf16>, vector<8x256xbf16>, vector<8x256xf32> -> vector<8x256xf32>
    %15 = vector.broadcast %5 : vector<8x1xf32> to vector<8x256xf32>
    %16 = arith.mulf %15, %14 : vector<8x256xf32>
    %17 = vector.broadcast %6 : vector<8x1xf32> to vector<8x256xf32>
    %18 = arith.mulf %17, %11 : vector<8x256xf32>
    %19 = arith.addf %16, %18 : vector<8x256xf32>
    %20 = arith.addf %19, %10 : vector<8x256xf32>
    %21 = vector.broadcast %7 : vector<8x1xf32> to vector<8x256xf32>
    %22 = arith.addf %20, %21 : vector<8x256xf32>
    %23 = arith.mulf %22, %22 : vector<8x256xf32>
    %cst_11 = arith.constant dense<0.000000e+00> : vector<8xf32>
    %24 = vector.multi_reduction <add>, %23, %cst_11 [1] : vector<8x256xf32> to vector<8xf32>
    %25 = vector.shape_cast %24 : vector<8xf32> to vector<8x1xf32>
    %26 = arith.mulf %8, %25 : vector<8x1xf32>
    %c0_12 = arith.constant 0 : index
    %c0_13 = arith.constant 0 : index
    %27 = vector.load %arg5[%c0_12, %c0_13] : memref<8x1xf32, #tpu.memory_space<vmem>>, vector<8x1xf32>
    tpu.vector_store %arg5[%c0_12, %c0_13], %26 {strides = array<i32>} : memref<8x1xf32, #tpu.memory_space<vmem>>, vector<8x1xf32>,
    return
  }
  func.func @transform_0(%arg0: i32) -> (i32, i32) {
    %c0_i32 = arith.constant 0 : i32
    %c0_i32_0 = arith.constant 0 : i32
    return %arg0, %c0_i32 : i32, i32
  }
  func.func @transform_1(%arg0: i32) -> (i32, i32) {
    %c0_i32 = arith.constant 0 : i32
    %c0_i32_0 = arith.constant 0 : i32
    return %arg0, %c0_i32 : i32, i32
  }
  func.func @transform_2(%arg0: i32) -> (i32, i32) {
    %c0_i32 = arith.constant 0 : i32
    %c0_i32_0 = arith.constant 0 : i32
    return %arg0, %c0_i32 : i32, i32
  }
  func.func @transform_3(%arg0: i32) -> (i32, i32) {
    %c0_i32 = arith.constant 0 : i32
    %c0_i32_0 = arith.constant 0 : i32
    %c0_i32_1 = arith.constant 0 : i32
    return %c0_i32, %c0_i32_0 : i32, i32
  }
  func.func @transform_4(%arg0: i32) -> (i32, i32) {
    %c0_i32 = arith.constant 0 : i32
    %c0_i32_0 = arith.constant 0 : i32
    return %arg0, %c0_i32 : i32, i32
  }
}

</mosaic_0001>

<llo_original>
// kernel: tpu_custom_call.1
$region0: #{tpu_custom_call.1}
  #allocation0 [shape = 'u32[]', space=smem, size = 0x4, offset = 0x4, fixed_abs, tag = 'smem constant byte address 0x4 - core index']
  #allocation1 [shape = 'u32[144,128]{1,0:T(1,128)}', space=vmem, size = 0x12000, scoped, tag = 'internal scratch']
  %s0 = inlined_call_operand.hbm [shape: f32[8,5], index: 0, kind: input, shape index: {}]
  %s1 = inlined_call_operand.hbm [shape: bf16[8,256], index: 1, kind: input, shape index: {}]
  %s2 = inlined_call_operand.hbm [shape: bf16[8,256], index: 2, kind: input, shape index: {}]
  %s3 = inlined_call_operand.vmem [shape: bf16[8,8], index: 3, kind: input, shape index: {}]
  %s4 = inlined_call_operand.vmem [shape: f32[8,1], index: 4, kind: output, shape index: {}]
  %s5 = sld [smem:[#allocation0]]
  $region38: #{tpu_custom_call.1} parent=0
    _
  %s7 = ssub.s32 1, %s5
  %s8 = scalar_select 0, %s7, %s5
  $region1: #{tpu_custom_call.1} parent=0
    #allocation2 [shape = 'u8[4096]{0}', space=vmem, size = 0x1000, scoped, tag = 'input window, operand 0, single buffered']
    #allocation3 [shape = 's32[1]{0}', space=sflag, size = 0x4, scoped, tag = 'scoped memory for tpu_custom_call.1']
    #allocation4 [shape = 'u8[4096]{0}', space=vmem, size = 0x1000, scoped, tag = 'input window, operand 1, single buffered']
    #allocation5 [shape = 's32[1]{0}', space=sflag, size = 0x4, scoped, tag = 'scoped memory for tpu_custom_call.1']
    #allocation6 [shape = 'u8[4096]{0}', space=vmem, size = 0x1000, scoped, tag = 'input window, operand 2, single buffered']
    %9 = vsyncpa [#allocation3], 0
    %10 = vsyncpa [#allocation5], 0
    // Predicated region
    $region2: #{tpu_custom_call.1} parent=1 // pred_check
      _
    $region3: #{tpu_custom_call.1} parent=1 // pred_check_branch
      %12 = sbr.rel (0) target = $region5
    $region4: #{tpu_custom_call.1} parent=1 // pred_region
      %s14 = ssub.s32 128, 128
      %15 = vsyncadd [#allocation3], %s14
      %s17 = sshll.u32 [#allocation2], 4
      %s18 = int_to_ptr.vmem [resolvable:$true] %s17
      %20 = dma.hbm_to_vmem [thread:$0]  %s0, 128, %s18, [#allocation3]
    $region5: #{tpu_custom_call.1} parent=1 // pred_fallthru
      _
    // Predicated region
    $region6: #{tpu_custom_call.1} parent=1 // pred_check
      _
    $region7: #{tpu_custom_call.1} parent=1 // pred_check_branch
      %22 = sbr.rel (0) target = $region9
    $region8: #{tpu_custom_call.1} parent=1 // pred_region
      %s24 = ssub.s32 128, 128
      %25 = vsyncadd [#allocation5], %s24
      %s27 = sshll.u32 [#allocation4], 4
      %s28 = int_to_ptr.vmem [resolvable:$true] %s27
      %30 = dma.hbm_to_vmem [thread:$0]  %s1, 128, %s28, [#allocation5]
    $region9: #{tpu_custom_call.1} parent=1 // pred_fallthru
      _
    // Predicated region
    $region10: #{tpu_custom_call.1} parent=1 // pred_check
      _
    $region11: #{tpu_custom_call.1} parent=1 // pred_check_branch
      %32 = sbr.rel (0) target = $region13
    $region12: #{tpu_custom_call.1} parent=1 // pred_region
      %s34 = ssub.s32 128, 128
      %35 = vsyncadd [#allocation5], %s34
      %s37 = sshll.u32 [#allocation6], 4
      %s38 = int_to_ptr.vmem [resolvable:$true] %s37
      %40 = dma.hbm_to_vmem [thread:$0]  %s2, 128, %s38, [#allocation5]
    $region13: #{tpu_custom_call.1} parent=1 // pred_fallthru
      _
    // Predicated region
    $region14: #{tpu_custom_call.1} parent=1 // pred_check
      _
    $region15: #{tpu_custom_call.1} parent=1 // pred_check_branch
      %42 = sbr.rel (0) target = $region17
    $region16: #{tpu_custom_call.1} parent=1 // pred_region
      _
    $region17: #{tpu_custom_call.1} parent=1 // pred_fallthru
      _
    // Predicated region
    $region18: #{tpu_custom_call.1} parent=1 // pred_check
      _
    $region19: #{tpu_custom_call.1} parent=1 // pred_check_branch
      %44 = sbr.rel (0) target = $region21
    $region20: #{tpu_custom_call.1} parent=1 // pred_region
      %45 = dma.done [#allocation3], 128
    $region21: #{tpu_custom_call.1} parent=1 // pred_fallthru
      _
    // Predicated region
    $region22: #{tpu_custom_call.1} parent=1 // pred_check
      _
    $region23: #{tpu_custom_call.1} parent=1 // pred_check_branch
      %47 = sbr.rel (0) target = $region25
    $region24: #{tpu_custom_call.1} parent=1 // pred_region
      %48 = dma.done [#allocation5], 128
    $region25: #{tpu_custom_call.1} parent=1 // pred_fallthru
      _
    // Predicated region
    $region26: #{tpu_custom_call.1} parent=1 // pred_check
      _
    $region27: #{tpu_custom_call.1} parent=1 // pred_check_branch
      %50 = sbr.rel (0) target = $region29
    $region28: #{tpu_custom_call.1} parent=1 // pred_region
      %51 = dma.done [#allocation5], 128
    $region29: #{tpu_custom_call.1} parent=1 // pred_fallthru
      _
    %v53 = vld [vmem:[#allocation4] sm:$0xff]
    %v54 = vunpack.c.l.bf16 %v53
    %v55 = vunpack.c.h.bf16 %v53
    %v56 = vld [vmem:[#allocation6] sm:$0xff]
    %v57 = vunpack.c.l.bf16 %v56
    %v58 = vunpack.c.h.bf16 %v56
    %v59 = vld [vmem:[#allocation2] sm:$0xff]
    %61 = vset.pattern.permute.xlu0 0
    %62 = vperm.xlu0 %61, %v59
    %v63 = vpop.permute.xlu0 %62
    %v65 = vmul.f32 %v57, %v63
    %v66 = vmul.f32 %v58, %v63
    %v67 = vadd.f32 %v54, %v65
    %v68 = vadd.f32 %v55, %v66
    %v69 = vld [vmem:[%s3] sm:$0xf]
    %v70 = vpack.c.bf16 %v67, %v67
    %v71 = vpack.c.bf16 %v68, %v68
    %vm72 = vcmask 64512
    %v74 = vsel %vm72, %v69, 0
    %vm76 = vcmask 1043456
    %v78 = vsel %vm76, %v70, 0
    %v81 = vsel %vm76, %v71, 0
    %83 = vmatprep.subr.bf16.mxu0 0
    %84 = vmatpush1.bf16.msra.mxu0 0
    %85 = vmatprep.subr.bf16.mxu0 0
    %86 = vmatpush1.bf16.msra.mxu0 0
    %87 = vmatprep.subr.bf16.mxu0 0
    %88 = vmatpush1.bf16.msra.mxu0 0
    %89 = vmatprep.subr.bf16.mxu0 0
    %90 = vmatpush1.bf16.msra.mxu0 0
    %91 = vmatprep.subr.bf16.mxu0 0
    %92 = vmatpush1.bf16.msra.mxu0 0
    %93 = vmatprep.subr.bf16.mxu0 0
    %94 = vmatpush1.bf16.msra.mxu0 0
    %95 = vmatprep.subr.bf16.mxu0 0
    %96 = vmatpush1.bf16.msra.mxu0 0
    %97 = vmatprep.subr.bf16.mxu0 %v81
    %98 = vmatpush1.bf16.msra.mxu0 %v78
    %99 = vmatprep.subr.bf16.mxu0 0
    %100 = vmatpush2.bf16.msra.mxu0 0
    %101 = vmatprep.subr.bf16.mxu0 0
    %102 = vmatpush2.bf16.msra.mxu0 0
    %103 = vmatprep.subr.bf16.mxu0 0
    %104 = vmatpush2.bf16.msra.mxu0 0
    %105 = vmatprep.subr.bf16.mxu0 0
    %106 = vmatpush2.bf16.msra.mxu0 0
    %107 = vmatprep.subr.bf16.mxu0 0
    %108 = vmatpush2.bf16.msra.mxu0 0
    %109 = vmatprep.subr.bf16.mxu0 0
    %110 = vmatpush2.bf16.msra.mxu0 0
    %111 = vmatprep.subr.bf16.mxu0 0
    %112 = vmatpush2.bf16.msra.mxu0 0
    %113 = vmatprep.subr.bf16.mxu0 0
    %114 = vmatpush2.bf16.msra.mxu0 0
    %115 = vmatprep.mubr.bf16.mxu0 0
    %116 = vmatmul.mubr.bf16.gmra.mxu0 %v74
    %v117 = vpop.f32.mrf.mxu0
    %v118 = vadd.f32 0.0, %v117
    %v119 = vpop.f32.mrf.mxu0
    %v120 = vadd.f32 0.0, %v119
    %v121 = vpop.f32.mrf.mxu0
    %v122 = vpop.f32.mrf.mxu0
    %123 = vdwg.mxu0
    %124 = vset.pattern.permute.xlu0 1
    %125 = vperm.xlu0 %124, %v59
    %v126 = vpop.permute.xlu0 %125
    %v128 = vmul.f32 %v126, %v118
    %v129 = vmul.f32 %v126, %v120
    %130 = vset.pattern.permute.xlu0 2
    %131 = vperm.xlu0 %130, %v59
    %v132 = vpop.permute.xlu0 %131
    %v134 = vmul.f32 %v132, %v67
    %v135 = vmul.f32 %v132, %v68
    %v136 = vadd.f32 %v128, %v134
    %v137 = vadd.f32 %v129, %v135
    %v138 = vadd.f32 %v136, %v65
    %v139 = vadd.f32 %v137, %v66
    %140 = vset.pattern.permute.xlu0 3
    %141 = vperm.xlu0 %140, %v59
    %v142 = vpop.permute.xlu0 %141
    %v144 = vadd.f32 %v138, %v142
    %v145 = vadd.f32 %v139, %v142
    %v146 = vmul.f32 %v144, %v144
    %v147 = vmul.f32 %v145, %v145
    %v148 = vadd.f32 %v146, %v147
    %149 = vadd.xlane.f32.xlu0 %v148
    %v150 = vpop.xlane.xlu0 %149
    %v151 = vmul.f32 %v59, %v150
    %153 = vrot.lane.b32.xlu0 %v151, 124
    %v154 = vpop.permute.xlu0 %153
    %vm156 = vcmask 7168
    %157 = vst.msk [vmem:[%s4] sm:$0xff] %vm156, %v154
    // Predicated region
    $region30: #{tpu_custom_call.1} parent=1 // pred_check
      _
    $region31: #{tpu_custom_call.1} parent=1 // pred_check_branch
      %159 = sbr.rel (0) target = $region33
    $region32: #{tpu_custom_call.1} parent=1 // pred_region
      _
    $region33: #{tpu_custom_call.1} parent=1 // pred_fallthru
      _
    // Predicated region
    $region34: #{tpu_custom_call.1} parent=1 // pred_check
      _
    $region35: #{tpu_custom_call.1} parent=1 // pred_check_branch
      %161 = sbr.rel (0) target = $region37
    $region36: #{tpu_custom_call.1} parent=1 // pred_region
      _
    $region37: #{tpu_custom_call.1} parent=1 // pred_fallthru
      _
    %162 = vsyncpa [#allocation3], 1
    %163 = vsyncpa [#allocation5], 1

</llo_original>
